<compile_context>
chip_gen: v6e
topology: v6e:2x2x1
jax: 0.10.0
libtpu: 0.0.40
codegen_flags: <defaults>
</compile_context>

<pallas_src>
import functools

import jax
import jax.numpy as jnp
from jax.experimental import pallas as pl
from jax.experimental.pallas import tpu as pltpu


def _round_up(x, m):
    return (x + m - 1) // m * m


def _weight_chain(w_refs, left_to_right):
    """Chained matmul of the 5 weights (already in compute dtype), f32 accumulation."""
    f32 = jnp.float32
    cd = w_refs[0].dtype
    if left_to_right:
        acc = jnp.dot(w_refs[0][...], w_refs[1][...], preferred_element_type=f32)
        for w in w_refs[2:]:
            acc = jnp.dot(acc.astype(cd), w[...], preferred_element_type=f32)
    else:
        acc = jnp.dot(w_refs[-2][...], w_refs[-1][...], preferred_element_type=f32)
        for w in reversed(w_refs[:-2]):
            acc = jnp.dot(w[...], acc.astype(cd), preferred_element_type=f32)
    return acc  # (input_dim, od) f32


def _fused_kernel(z_ref, w0_ref, w1_ref, w2_ref, w3_ref, w4_ref,
                  xrecon_ref, sig_ref, *, left_to_right, compute_dtype):
    """Whole problem in one invocation (small shapes): sigmatrix + z @ sigmatrix."""
    acc = _weight_chain((w0_ref, w1_ref, w2_ref, w3_ref, w4_ref), left_to_right)
    sig = jnp.maximum(acc, 0.0)                      # F.relu (f32)
    sig_ref[...] = sig.astype(sig_ref.dtype)
    zt = z_ref[...].astype(compute_dtype)            # in-kernel cast (no-op for f32)
    xrecon_ref[...] = jnp.dot(
        zt, sig.astype(compute_dtype), preferred_element_type=jnp.float32
    ).astype(xrecon_ref.dtype)


def _sigmatrix_kernel(*refs, left_to_right, emit_cast):
    """Kernel A: batch-independent sigmatrix, computed once (grid=())."""
    w_refs = refs[:5]
    sig_ref = refs[5]
    acc = _weight_chain(w_refs, left_to_right)
    sig = jnp.maximum(acc, 0.0)
    sig_ref[...] = sig.astype(sig_ref.dtype)          # f32 sigmatrix (returned)
    if emit_cast:                                     # extra compute-dtype copy for kernel B
        refs[6][...] = sig.astype(refs[6].dtype)


def _zmatmul_kernel(z_ref, sig_ref, xrecon_ref, *, compute_dtype):
    """Kernel B: one batch tile of x_recon = z @ sigmatrix (batch-parallel grid)."""
    zt = z_ref[...]
    if zt.dtype != compute_dtype:
        zt = zt.astype(compute_dtype)                 # hidden under DMA/MXU, no HBM pass
    xrecon_ref[...] = jnp.dot(
        zt, sig_ref[...], preferred_element_type=jnp.float32
    ).astype(xrecon_ref.dtype)


def channel_decoder(z, w0, w1, w2, w3, w4, *,
                    compute_dtype=jnp.float32, batch_tile=512):
    batch, input_dim = z.shape
    output_dim = w4.shape[1]
    f32 = jnp.float32

    # ---- lane-dense output padding only when it actually pays off --------------
    # Narrow outputs (<= 128 lanes) would multiply x_recon write bytes; keep them
    # natural width (masked vst) and only pad wide-but-misaligned output dims.
    od = output_dim
    if output_dim > 128 and output_dim % 128 != 0:
        od = _round_up(output_dim, 128)
        w4 = jnp.pad(w4, ((0, 0), (0, od - output_dim)))

    # Weights are tiny: wrapper-side cast is fine. z is cast inside the kernel.
    if compute_dtype != f32:
        w0, w1, w2, w3, w4 = (w.astype(compute_dtype) for w in (w0, w1, w2, w3, w4))

    # Cheaper matmul-chain association: keep intermediates on the small side.
    left_to_right = input_dim <= od

    # ---- per-generation VMEM budget --------------------------------------------
    try:
        vmem_cap = pltpu.get_tpu_info().vmem_capacity_bytes
    except Exception:
        vmem_cap = 64 << 20
    usable = int(vmem_cap * 0.80)   # ~102 MiB on v5e/v6e, ~51 MiB on v7x

    itemsize_cd = jnp.dtype(compute_dtype).itemsize
    wt_bytes = sum(int(w.size) * itemsize_cd for w in (w0, w1, w2, w3, w4))
    sig_f32_bytes = input_dim * od * 4
    sig_cd_bytes = input_dim * od * itemsize_cd
    inter_bytes = 4 * max(input_dim, 512) * max(od, 512)   # largest chain intermediate

    # ---- fast path: everything in a single invocation (grid=()) ----------------
    fused_bytes = (batch * input_dim * 4 + batch * od * 4
                   + wt_bytes + sig_f32_bytes + 2 * inter_bytes)
    if batch <= batch_tile and fused_bytes <= usable // 2:
        kernel = functools.partial(_fused_kernel, left_to_right=left_to_right,
                                   compute_dtype=compute_dtype)
        x_recon, sig = pl.pallas_call(
            kernel,
            out_shape=(jax.ShapeDtypeStruct((batch, od), f32),
                       jax.ShapeDtypeStruct((input_dim, od), f32)),
            compiler_params=pltpu.CompilerParams(vmem_limit_bytes=usable),
        )(z, w0, w1, w2, w3, w4)
        if od != output_dim:
            x_recon = x_recon[:, :output_dim]
            sig = sig[:, :output_dim]
        return x_recon, sig

    # ---- Kernel A: sigmatrix once, batch-independent (grid=()) -----------------
    # NOTE: for pathologically large input_dim*output_dim the sigmatrix itself may
    # exceed VMEM; that case would need an output-dim-tiled chain (not needed here).
    emit_cast = compute_dtype != f32
    sig_out_shapes = [jax.ShapeDtypeStruct((input_dim, od), f32)]
    if emit_cast:
        sig_out_shapes.append(jax.ShapeDtypeStruct((input_dim, od), compute_dtype))
    sig_kernel = functools.partial(_sigmatrix_kernel, left_to_right=left_to_right,
                                   emit_cast=emit_cast)
    sig_outs = pl.pallas_call(
        sig_kernel,
        out_shape=tuple(sig_out_shapes),
        compiler_params=pltpu.CompilerParams(vmem_limit_bytes=usable),
    )(w0, w1, w2, w3, w4)
    sig_f32 = sig_outs[0]
    sig_mm = sig_outs[1] if emit_cast else sig_outs[0]

    # ---- Kernel B: batch-parallel, pipelined z @ sigmatrix ----------------------
    # Shrink the batch tile only until (single-buffered sigmatrix + double-buffered
    # z / x_recon tiles) fits the per-generation VMEM budget.
    tb = batch if batch <= batch_tile else batch_tile
    per_row = 2 * input_dim * 4 + 2 * od * 4          # z + x tiles, double-buffered
    while tb > 8 and sig_cd_bytes + tb * per_row + (4 << 20) > usable:
        tb = max(8, _round_up(tb // 2, 8))
    grid = (pl.cdiv(batch, tb),)

    mm_kernel = functools.partial(_zmatmul_kernel, compute_dtype=compute_dtype)
    x_recon = pl.pallas_call(
        mm_kernel,
        grid=grid,
        in_specs=[
            pl.BlockSpec((tb, input_dim), lambda i: (i, 0)),        # pipelined z tile
            pl.BlockSpec((input_dim, od), lambda i: (0, 0),
                         pipeline_mode=pl.Buffered(1)),             # resident sigmatrix
        ],
        out_specs=pl.BlockSpec((tb, od), lambda i: (i, 0)),
        out_shape=jax.ShapeDtypeStruct((batch, od), f32),
        compiler_params=pltpu.CompilerParams(
            dimension_semantics=("parallel",),   # batch tiles independent -> megacore on v7x
            vmem_limit_bytes=usable,
        ),
    )(z, sig_mm)

    if od != output_dim:
        x_recon = x_recon[:, :output_dim]
        sig_f32 = sig_f32[:, :output_dim]
    return x_recon, sig_f32


def init_params(key, input_dim, output_dim):
    """Deterministic synthetic weights, stored as weight.T (in, out)."""
    dims = [input_dim, 64, 128, 256, 512, output_dim]
    keys = jax.random.split(key, len(dims) - 1)
    ws = []
    for k, d_in, d_out in zip(keys, dims[:-1], dims[1:]):
        bound = 1.0 / jnp.sqrt(jnp.float32(d_in))
        ws.append(jax.random.uniform(k, (d_in, d_out), jnp.float32, -bound, bound))
    return ws


if __name__ == "__main__":
    input_dim, output_dim, batch = 16, 32, 8

    key = jax.random.PRNGKey(0)
    kz, kw = jax.random.split(key)
    z = jax.random.normal(kz, (batch, input_dim), jnp.float32)
    w0, w1, w2, w3, w4 = init_params(kw, input_dim, output_dim)

    decode = jax.jit(channel_decoder)

    # Small shapes -> fused grid=() fast path.
    x_recon, sigmatrix = decode(z, w0, w1, w2, w3, w4)
    jax.block_until_ready((x_recon, sigmatrix))

    # Pure-JAX reference of the forward semantics.
    sig_ref = jnp.maximum((((w0 @ w1) @ w2) @ w3) @ w4, 0.0)
    x_ref = z @ sig_ref
    assert sigmatrix.shape == (input_dim, output_dim)
    assert x_recon.shape == (batch, output_dim)
    assert jnp.allclose(sigmatrix, sig_ref, atol=1e-4, rtol=1e-4)
    assert jnp.allclose(x_recon, x_ref, atol=1e-4, rtol=1e-4)

    # Larger batch -> two-kernel path (batch-parallel grid, resident sigmatrix).
    big_batch = 1024
    zb = jax.random.normal(kz, (big_batch, input_dim), jnp.float32)
    xb, sb = decode(zb, w0, w1, w2, w3, w4)
    jax.block_until_ready((xb, sb))
    assert xb.shape == (big_batch, output_dim)
    assert jnp.allclose(sb, sig_ref, atol=1e-4, rtol=1e-4)
    assert jnp.allclose(xb, zb @ sig_ref, atol=1e-4, rtol=1e-4)

    print("KERNEL_OK")
</pallas_src>

<mosaic_0001>
module attributes {stable_mosaic.version = 11 : i64} {
  func.func @_fused_kernel(%arg0: memref<8x16xf32, #tpu.memory_space<vmem>>, %arg1: memref<16x64xf32, #tpu.memory_space<vmem>>, %arg2: memref<64x128xf32, #tpu.memory_space<vmem>>, %arg3: memref<128x256xf32, #tpu.memory_space<vmem>>, %arg4: memref<256x512xf32, #tpu.memory_space<vmem>>, %arg5: memref<512x32xf32, #tpu.memory_space<vmem>>, %arg6: memref<8x32xf32, #tpu.memory_space<vmem>>, %arg7: memref<16x32xf32, #tpu.memory_space<vmem>>) attributes {dimension_semantics = [], scalar_prefetch = 0 : i64, scratch_operands = 0 : i64, tpu.core_type = #tpu.core_type<tc>} {
    %c0 = arith.constant 0 : index
    %c0_0 = arith.constant 0 : index
    %0 = vector.load %arg1[%c0, %c0_0] : memref<16x64xf32, #tpu.memory_space<vmem>>, vector<16x64xf32>
    %c0_1 = arith.constant 0 : index
    %c0_2 = arith.constant 0 : index
    %1 = vector.load %arg2[%c0_1, %c0_2] : memref<64x128xf32, #tpu.memory_space<vmem>>, vector<64x128xf32>
    %cst = arith.constant dense<0.000000e+00> : vector<16x128xf32>
    %2 = tpu.matmul %0, %1, %cst {dimension_numbers = #tpu.dot_dimension_numbers<[1], [0], [0], [1], [0, 0, 1, 1], [], []>} : vector<16x64xf32>, vector<64x128xf32>, vector<16x128xf32> -> vector<16x128xf32>
    %c0_3 = arith.constant 0 : index
    %c0_4 = arith.constant 0 : index
    %3 = vector.load %arg3[%c0_3, %c0_4] : memref<128x256xf32, #tpu.memory_space<vmem>>, vector<128x256xf32>
    %cst_5 = arith.constant dense<0.000000e+00> : vector<16x256xf32>
    %4 = tpu.matmul %2, %3, %cst_5 {dimension_numbers = #tpu.dot_dimension_numbers<[1], [0], [0], [1], [0, 0, 1, 1], [], []>} : vector<16x128xf32>, vector<128x256xf32>, vector<16x256xf32> -> vector<16x256xf32>
    %c0_6 = arith.constant 0 : index
    %c0_7 = arith.constant 0 : index
    %5 = vector.load %arg4[%c0_6, %c0_7] : memref<256x512xf32, #tpu.memory_space<vmem>>, vector<256x512xf32>
    %cst_8 = arith.constant dense<0.000000e+00> : vector<16x512xf32>
    %6 = tpu.matmul %4, %5, %cst_8 {dimension_numbers = #tpu.dot_dimension_numbers<[1], [0], [0], [1], [0, 0, 1, 1], [], []>} : vector<16x256xf32>, vector<256x512xf32>, vector<16x512xf32> -> vector<16x512xf32>
    %c0_9 = arith.constant 0 : index
    %c0_10 = arith.constant 0 : index
    %7 = vector.load %arg5[%c0_9, %c0_10] : memref<512x32xf32, #tpu.memory_space<vmem>>, vector<512x32xf32>
    %cst_11 = arith.constant dense<0.000000e+00> : vector<16x32xf32>
    %8 = tpu.matmul %6, %7, %cst_11 {dimension_numbers = #tpu.dot_dimension_numbers<[1], [0], [0], [1], [0, 0, 1, 1], [], []>} : vector<16x512xf32>, vector<512x32xf32>, vector<16x32xf32> -> vector<16x32xf32>
    %cst_12 = arith.constant 0.000000e+00 : f32
    %9 = vector.broadcast %cst_12 : f32 to vector<16x32xf32>
    %10 = arith.maximumf %8, %9 : vector<16x32xf32>
    %c0_13 = arith.constant 0 : index
    %c0_14 = arith.constant 0 : index
    %11 = vector.load %arg7[%c0_13, %c0_14] : memref<16x32xf32, #tpu.memory_space<vmem>>, vector<16x32xf32>
    tpu.vector_store %arg7[%c0_13, %c0_14], %10 {strides = array<i32>} : memref<16x32xf32, #tpu.memory_space<vmem>>, vector<16x32xf32>,
    %c0_15 = arith.constant 0 : index
    %c0_16 = arith.constant 0 : index
    %12 = vector.load %arg0[%c0_15, %c0_16] : memref<8x16xf32, #tpu.memory_space<vmem>>, vector<8x16xf32>
    %cst_17 = arith.constant dense<0.000000e+00> : vector<8x32xf32>
    %13 = tpu.matmul %12, %10, %cst_17 {dimension_numbers = #tpu.dot_dimension_numbers<[1], [0], [0], [1], [0, 0, 1, 1], [], []>} : vector<8x16xf32>, vector<16x32xf32>, vector<8x32xf32> -> vector<8x32xf32>
    %c0_18 = arith.constant 0 : index
    %c0_19 = arith.constant 0 : index
    %14 = vector.load %arg6[%c0_18, %c0_19] : memref<8x32xf32, #tpu.memory_space<vmem>>, vector<8x32xf32>
    tpu.vector_store %arg6[%c0_18, %c0_19], %13 {strides = array<i32>} : memref<8x32xf32, #tpu.memory_space<vmem>>, vector<8x32xf32>,
    return
  }
}

</mosaic_0001>

<llo_original>
// kernel: channel_decoder.1
$region0: #{channel_decoder.1}
  #allocation0 [shape = 'u32[]', space=smem, size = 0x4, offset = 0x4, fixed_abs, tag = 'smem constant byte address 0x4 - core index']
  #allocation1 [shape = 'u32[144,128]{1,0:T(1,128)}', space=vmem, size = 0x12000, scoped, tag = 'internal scratch']
  %s0 = inlined_call_operand.vmem [shape: f32[8,16], index: 0, kind: input, shape index: {}]
  %s1 = inlined_call_operand.vmem [shape: f32[16,64], index: 1, kind: input, shape index: {}]
  %s2 = inlined_call_operand.vmem [shape: f32[64,128], index: 2, kind: input, shape index: {}]
  %s3 = inlined_call_operand.vmem [shape: f32[128,256], index: 3, kind: input, shape index: {}]
  %s4 = inlined_call_operand.hbm [shape: f32[256,512], index: 4, kind: input, shape index: {}]
  %s5 = inlined_call_operand.vmem [shape: f32[512,32], index: 5, kind: input, shape index: {}]
  %s6 = inlined_call_operand.hbm [shape: f32[8,32], index: 6, kind: output, shape index: {0}]
  %s7 = inlined_call_operand.hbm [shape: f32[16,32], index: 7, kind: output, shape index: {1}]
  %8 = xla_tuple %s6, %s7
  %s9 = sld [smem:[#allocation0]]
  $region46: #{channel_decoder.1} parent=0
    _
  %s11 = ssub.s32 1, %s9
  %s12 = scalar_select 0, %s11, %s9
  $region1: #{channel_decoder.1} parent=0
    #allocation2 [shape = 'u8[524288]{0}', space=vmem, size = 0x80000, scoped, tag = 'input window, operand 4, single buffered']
    #allocation3 [shape = 's32[1]{0}', space=sflag, size = 0x4, scoped, tag = 'scoped memory for channel_decoder.1']
    #allocation4 [shape = 's32[1]{0}', space=sflag, size = 0x4, scoped, tag = 'scoped memory for channel_decoder.1']
    #allocation5 [shape = 'u8[4096]{0}', space=vmem, size = 0x1000, scoped, tag = 'output window, operand 0, single buffered']
    #allocation6 [shape = 'u8[8192]{0}', space=vmem, size = 0x2000, scoped, tag = 'output window, operand 1, single buffered']
    #allocation7 [shape = 's32[1]{0}', space=sflag, size = 0x4, scoped, tag = 'scoped memory for channel_decoder.1']
    %13 = vsyncpa [#allocation3], 0
    %14 = vsyncpa [#allocation4], 0
    %15 = vsyncpa [#allocation7], 0
    // Predicated region
    $region2: #{channel_decoder.1} parent=1 // pred_check
      _
    $region3: #{channel_decoder.1} parent=1 // pred_check_branch
      %17 = sbr.rel (0) target = $region5
    $region4: #{channel_decoder.1} parent=1 // pred_region
      _
    $region5: #{channel_decoder.1} parent=1 // pred_fallthru
      _
    // Predicated region
    $region6: #{channel_decoder.1} parent=1 // pred_check
      _
    $region7: #{channel_decoder.1} parent=1 // pred_check_branch
      %19 = sbr.rel (0) target = $region9
    $region8: #{channel_decoder.1} parent=1 // pred_region
      _
    $region9: #{channel_decoder.1} parent=1 // pred_fallthru
      _
    // Predicated region
    $region10: #{channel_decoder.1} parent=1 // pred_check
      _
    $region11: #{channel_decoder.1} parent=1 // pred_check_branch
      %21 = sbr.rel (0) target = $region13
    $region12: #{channel_decoder.1} parent=1 // pred_region
      _
    $region13: #{channel_decoder.1} parent=1 // pred_fallthru
      _
    // Predicated region
    $region14: #{channel_decoder.1} parent=1 // pred_check
      _
    $region15: #{channel_decoder.1} parent=1 // pred_check_branch
      %23 = sbr.rel (0) target = $region17
    $region16: #{channel_decoder.1} parent=1 // pred_region
      _
    $region17: #{channel_decoder.1} parent=1 // pred_fallthru
      _
    // Predicated region
    $region18: #{channel_decoder.1} parent=1 // pred_check
      _
    $region19: #{channel_decoder.1} parent=1 // pred_check_branch
      %25 = sbr.rel (0) target = $region21
    $region20: #{channel_decoder.1} parent=1 // pred_region
      %s27 = ssub.s32 16384, 16384
      %28 = vsyncadd [#allocation3], %s27
      %s29 = sshll.u32 [#allocation2], 4
      %s30 = int_to_ptr.vmem [resolvable:$true] %s29
      %35 = dma.hbm_to_vmem [thread:$0]  %s4, 16384, %s30, [#allocation3], 512, 512, 32
    $region21: #{channel_decoder.1} parent=1 // pred_fallthru
      _
    // Predicated region
    $region22: #{channel_decoder.1} parent=1 // pred_check
      _
    $region23: #{channel_decoder.1} parent=1 // pred_check_branch
      %37 = sbr.rel (0) target = $region25
    $region24: #{channel_decoder.1} parent=1 // pred_region
      _
    $region25: #{channel_decoder.1} parent=1 // pred_fallthru
      _
    // Predicated region
    $region26: #{channel_decoder.1} parent=1 // pred_check
      _
    $region27: #{channel_decoder.1} parent=1 // pred_check_branch
      %39 = sbr.rel (0) target = $region29
    $region28: #{channel_decoder.1} parent=1 // pred_region
      %40 = dma.done [#allocation3], 16384
    $region29: #{channel_decoder.1} parent=1 // pred_fallthru
      _
    %v41 = vld [vmem:[%s1] sm:$0xff]
    %v42 = vld [vmem:[%s1 + $0x8] sm:$0xff]
    %v43 = vld [vmem:[%s2] sm:$0xff]
    %v44 = vld [vmem:[%s2 + $0x8] sm:$0xff]
    %v45 = vld [vmem:[%s2 + $0x10] sm:$0xff]
    %v46 = vld [vmem:[%s2 + $0x18] sm:$0xff]
    %v47 = vld [vmem:[%s2 + $0x20] sm:$0xff]
    %v48 = vld [vmem:[%s2 + $0x28] sm:$0xff]
    %v49 = vld [vmem:[%s2 + $0x30] sm:$0xff]
    %v50 = vld [vmem:[%s2 + $0x38] sm:$0xff]
    %vm51 = vcmask 523264
    %v53 = vsel %vm51, %v41, 0
    %v56 = vsel %vm51, %v42, 0
    %58 = vmatprep.subr.mxu0 0.0
    %59 = vmatpush1.msra.mxu0 0.0
    %60 = vmatprep.subr.mxu0 0.0
    %61 = vmatpush1.msra.mxu0 0.0
    %62 = vmatprep.subr.mxu0 0.0
    %63 = vmatpush1.msra.mxu0 0.0
    %64 = vmatprep.subr.mxu0 0.0
    %65 = vmatpush1.msra.mxu0 0.0
    %66 = vmatprep.subr.mxu0 0.0
    %67 = vmatpush1.msra.mxu0 0.0
    %68 = vmatprep.subr.mxu0 0.0
    %69 = vmatpush1.msra.mxu0 0.0
    %70 = vmatprep.subr.mxu0 0.0
    %71 = vmatpush1.msra.mxu0 0.0
    %72 = vmatprep.subr.mxu0 0.0
    %73 = vmatpush1.msra.mxu0 0.0
    %74 = vmatprep.subr.mxu0 0.0
    %75 = vmatpush1.msra.mxu0 %v50
    %76 = vmatprep.subr.mxu0 0.0
    %77 = vmatpush1.msra.mxu0 %v49
    %78 = vmatprep.subr.mxu0 0.0
    %79 = vmatpush1.msra.mxu0 %v48
    %80 = vmatprep.subr.mxu0 0.0
    %81 = vmatpush1.msra.mxu0 %v47
    %82 = vmatprep.subr.mxu0 0.0
    %83 = vmatpush1.msra.mxu0 %v46
    %84 = vmatprep.subr.mxu0 0.0
    %85 = vmatpush1.msra.mxu0 %v45
    %86 = vmatprep.subr.mxu0 0.0
    %87 = vmatpush1.msra.mxu0 %v44
    %88 = vmatprep.subr.mxu0 0.0
    %89 = vmatpush1.msra.mxu0 %v43
    %90 = vmatprep.subr.mxu0 0.0
    %91 = vmatpush2.msra.mxu0 0.0
    %92 = vmatprep.subr.mxu0 0.0
    %93 = vmatpush2.msra.mxu0 0.0
    %94 = vmatprep.subr.mxu0 0.0
    %95 = vmatpush2.msra.mxu0 0.0
    %96 = vmatprep.subr.mxu0 0.0
    %97 = vmatpush2.msra.mxu0 0.0
    %98 = vmatprep.subr.mxu0 0.0
    %99 = vmatpush2.msra.mxu0 0.0
    %100 = vmatprep.subr.mxu0 0.0
    %101 = vmatpush2.msra.mxu0 0.0
    %102 = vmatprep.subr.mxu0 0.0
    %103 = vmatpush2.msra.mxu0 0.0
    %104 = vmatprep.subr.mxu0 0.0
    %105 = vmatpush2.msra.mxu0 0.0
    %106 = vmatprep.subr.mxu0 0.0
    %107 = vmatpush2.msra.mxu0 0.0
    %108 = vmatprep.subr.mxu0 0.0
    %109 = vmatpush2.msra.mxu0 0.0
    %110 = vmatprep.subr.mxu0 0.0
    %111 = vmatpush2.msra.mxu0 0.0
    %112 = vmatprep.subr.mxu0 0.0
    %113 = vmatpush2.msra.mxu0 0.0
    %114 = vmatprep.subr.mxu0 0.0
    %115 = vmatpush2.msra.mxu0 0.0
    %116 = vmatprep.subr.mxu0 0.0
    %117 = vmatpush2.msra.mxu0 0.0
    %118 = vmatprep.subr.mxu0 0.0
    %119 = vmatpush2.msra.mxu0 0.0
    %120 = vmatprep.subr.mxu0 0.0
    %121 = vmatpush2.msra.mxu0 0.0
    %122 = vmatprep.mubr.f32.mxu0 0.0
    %123 = vmatmul.mubr.f32.gmra.mxu0 %v53
    %v124 = vpop.f32.mrf.mxu0
    %v125 = vadd.f32 0.0, %v124
    %v126 = vpop.f32.mrf.mxu0
    %127 = vmatprep.mubr.f32.mxu0 0.0
    %128 = vmatmul.mubr.f32.gmra.mxu0 %v56
    %v129 = vpop.f32.mrf.mxu0
    %v130 = vadd.f32 0.0, %v129
    %v131 = vpop.f32.mrf.mxu0
    %132 = vdwg.mxu0
    %v133 = vld [vmem:[%s3] sm:$0xff]
    %v134 = vld [vmem:[%s3 + $0x8] sm:$0xff]
    %v135 = vld [vmem:[%s3 + $0x10] sm:$0xff]
    %v136 = vld [vmem:[%s3 + $0x18] sm:$0xff]
    %v137 = vld [vmem:[%s3 + $0x20] sm:$0xff]
    %v138 = vld [vmem:[%s3 + $0x28] sm:$0xff]
    %v139 = vld [vmem:[%s3 + $0x30] sm:$0xff]
    %v140 = vld [vmem:[%s3 + $0x38] sm:$0xff]
    %v141 = vld [vmem:[%s3 + $0x40] sm:$0xff]
    %v142 = vld [vmem:[%s3 + $0x48] sm:$0xff]
    %v143 = vld [vmem:[%s3 + $0x50] sm:$0xff]
    %v144 = vld [vmem:[%s3 + $0x58] sm:$0xff]
    %v145 = vld [vmem:[%s3 + $0x60] sm:$0xff]
    %v146 = vld [vmem:[%s3 + $0x68] sm:$0xff]
    %v147 = vld [vmem:[%s3 + $0x70] sm:$0xff]
    %v148 = vld [vmem:[%s3 + $0x78] sm:$0xff]
    %v149 = vld [vmem:[%s3 + $0x80] sm:$0xff]
    %v150 = vld [vmem:[%s3 + $0x88] sm:$0xff]
    %v151 = vld [vmem:[%s3 + $0x90] sm:$0xff]
    %v152 = vld [vmem:[%s3 + $0x98] sm:$0xff]
    %v153 = vld [vmem:[%s3 + $0xa0] sm:$0xff]
    %v154 = vld [vmem:[%s3 + $0xa8] sm:$0xff]
    %v155 = vld [vmem:[%s3 + $0xb0] sm:$0xff]
    %v156 = vld [vmem:[%s3 + $0xb8] sm:$0xff]
    %v157 = vld [vmem:[%s3 + $0xc0] sm:$0xff]
    %v158 = vld [vmem:[%s3 + $0xc8] sm:$0xff]
    %v159 = vld [vmem:[%s3 + $0xd0] sm:$0xff]
    %v160 = vld [vmem:[%s3 + $0xd8] sm:$0xff]
    %v161 = vld [vmem:[%s3 + $0xe0] sm:$0xff]
    %v162 = vld [vmem:[%s3 + $0xe8] sm:$0xff]
    %v163 = vld [vmem:[%s3 + $0xf0] sm:$0xff]
    %v164 = vld [vmem:[%s3 + $0xf8] sm:$0xff]
    %165 = vmatprep.subr.mxu0 %v164
    %166 = vmatpush1.msra.mxu0 %v163
    %167 = vmatprep.subr.mxu0 %v162
    %168 = vmatpush1.msra.mxu0 %v161
    %169 = vmatprep.subr.mxu0 %v160
    %170 = vmatpush1.msra.mxu0 %v159
    %171 = vmatprep.subr.mxu0 %v158
    %172 = vmatpush1.msra.mxu0 %v157
    %173 = vmatprep.subr.mxu0 %v156
    %174 = vmatpush1.msra.mxu0 %v155
    %175 = vmatprep.subr.mxu0 %v154
    %176 = vmatpush1.msra.mxu0 %v153
    %177 = vmatprep.subr.mxu0 %v152
    %178 = vmatpush1.msra.mxu0 %v151
    %179 = vmatprep.subr.mxu0 %v150
    %180 = vmatpush1.msra.mxu0 %v149
    %181 = vmatprep.subr.mxu0 %v148
    %182 = vmatpush1.msra.mxu0 %v147
    %183 = vmatprep.subr.mxu0 %v146
    %184 = vmatpush1.msra.mxu0 %v145
    %185 = vmatprep.subr.mxu0 %v144
    %186 = vmatpush1.msra.mxu0 %v143
    %187 = vmatprep.subr.mxu0 %v142
    %188 = vmatpush1.msra.mxu0 %v141
    %189 = vmatprep.subr.mxu0 %v140
    %190 = vmatpush1.msra.mxu0 %v139
    %191 = vmatprep.subr.mxu0 %v138
    %192 = vmatpush1.msra.mxu0 %v137
    %193 = vmatprep.subr.mxu0 %v136
    %194 = vmatpush1.msra.mxu0 %v135
    %195 = vmatprep.subr.mxu0 %v134
    %196 = vmatpush1.msra.mxu0 %v133
    %197 = vmatprep.subr.mxu0 0.0
    %198 = vmatpush2.msra.mxu0 0.0
    %199 = vmatprep.subr.mxu0 0.0
    %200 = vmatpush2.msra.mxu0 0.0
    %201 = vmatprep.subr.mxu0 0.0
    %202 = vmatpush2.msra.mxu0 0.0
    %203 = vmatprep.subr.mxu0 0.0
    %204 = vmatpush2.msra.mxu0 0.0
    %205 = vmatprep.subr.mxu0 0.0
    %206 = vmatpush2.msra.mxu0 0.0
    %207 = vmatprep.subr.mxu0 0.0
    %208 = vmatpush2.msra.mxu0 0.0
    %209 = vmatprep.subr.mxu0 0.0
    %210 = vmatpush2.msra.mxu0 0.0
    %211 = vmatprep.subr.mxu0 0.0
    %212 = vmatpush2.msra.mxu0 0.0
    %213 = vmatprep.subr.mxu0 0.0
    %214 = vmatpush2.msra.mxu0 0.0
    %215 = vmatprep.subr.mxu0 0.0
    %216 = vmatpush2.msra.mxu0 0.0
    %217 = vmatprep.subr.mxu0 0.0
    %218 = vmatpush2.msra.mxu0 0.0
    %219 = vmatprep.subr.mxu0 0.0
    %220 = vmatpush2.msra.mxu0 0.0
    %221 = vmatprep.subr.mxu0 0.0
    %222 = vmatpush2.msra.mxu0 0.0
    %223 = vmatprep.subr.mxu0 0.0
    %224 = vmatpush2.msra.mxu0 0.0
    %225 = vmatprep.subr.mxu0 0.0
    %226 = vmatpush2.msra.mxu0 0.0
    %227 = vmatprep.subr.mxu0 0.0
    %228 = vmatpush2.msra.mxu0 0.0
    %229 = vmatprep.mubr.f32.mxu0 0.0
    %230 = vmatmul.mubr.f32.gmra.mxu0 %v125
    %v231 = vpop.f32.mrf.mxu0
    %v232 = vadd.f32 0.0, %v231
    %v233 = vpop.f32.mrf.mxu0
    %v234 = vadd.f32 0.0, %v233
    %235 = vmatprep.mubr.f32.mxu0 0.0
    %236 = vmatmul.mubr.f32.gmra.mxu0 %v130
    %v237 = vpop.f32.mrf.mxu0
    %v238 = vadd.f32 0.0, %v237
    %v239 = vpop.f32.mrf.mxu0
    %v240 = vadd.f32 0.0, %v239
    %241 = vdwg.mxu0
    %v242 = vld [vmem:[#allocation2] sm:$0xff]
    %v243 = vld [vmem:[#allocation2 + $0x8] sm:$0xff]
    %v244 = vld [vmem:[#allocation2 + $0x10] sm:$0xff]
    %v245 = vld [vmem:[#allocation2 + $0x18] sm:$0xff]
    %v246 = vld [vmem:[#allocation2 + $0x20] sm:$0xff]
    %v247 = vld [vmem:[#allocation2 + $0x28] sm:$0xff]
    %v248 = vld [vmem:[#allocation2 + $0x30] sm:$0xff]
    %v249 = vld [vmem:[#allocation2 + $0x38] sm:$0xff]
    %v250 = vld [vmem:[#allocation2 + $0x40] sm:$0xff]
    %v251 = vld [vmem:[#allocation2 + $0x48] sm:$0xff]
    %v252 = vld [vmem:[#allocation2 + $0x50] sm:$0xff]
    %v253 = vld [vmem:[#allocation2 + $0x58] sm:$0xff]
    %v254 = vld [vmem:[#allocation2 + $0x60] sm:$0xff]
    %v255 = vld [vmem:[#allocation2 + $0x68] sm:$0xff]
    %v256 = vld [vmem:[#allocation2 + $0x70] sm:$0xff]
    %v257 = vld [vmem:[#allocation2 + $0x78] sm:$0xff]
    %v258 = vld [vmem:[#allocation2 + $0x80] sm:$0xff]
    %v259 = vld [vmem:[#allocation2 + $0x88] sm:$0xff]
    %v260 = vld [vmem:[#allocation2 + $0x90] sm:$0xff]
    %v261 = vld [vmem:[#allocation2 + $0x98] sm:$0xff]
    %v262 = vld [vmem:[#allocation2 + $0xa0] sm:$0xff]
    %v263 = vld [vmem:[#allocation2 + $0xa8] sm:$0xff]
    %v264 = vld [vmem:[#allocation2 + $0xb0] sm:$0xff]
    %v265 = vld [vmem:[#allocation2 + $0xb8] sm:$0xff]
    %v266 = vld [vmem:[#allocation2 + $0xc0] sm:$0xff]
    %v267 = vld [vmem:[#allocation2 + $0xc8] sm:$0xff]
    %v268 = vld [vmem:[#allocation2 + $0xd0] sm:$0xff]
    %v269 = vld [vmem:[#allocation2 + $0xd8] sm:$0xff]
    %v270 = vld [vmem:[#allocation2 + $0xe0] sm:$0xff]
    %v271 = vld [vmem:[#allocation2 + $0xe8] sm:$0xff]
    %v272 = vld [vmem:[#allocation2 + $0xf0] sm:$0xff]
    %v273 = vld [vmem:[#allocation2 + $0xf8] sm:$0xff]
    %v274 = vld [vmem:[#allocation2 + $0x100] sm:$0xff]
    %v275 = vld [vmem:[#allocation2 + $0x108] sm:$0xff]
    %v276 = vld [vmem:[#allocation2 + $0x110] sm:$0xff]
    %v277 = vld [vmem:[#allocation2 + $0x118] sm:$0xff]
    %v278 = vld [vmem:[#allocation2 + $0x120] sm:$0xff]
    %v279 = vld [vmem:[#allocation2 + $0x128] sm:$0xff]
    %v280 = vld [vmem:[#allocation2 + $0x130] sm:$0xff]
    %v281 = vld [vmem:[#allocation2 + $0x138] sm:$0xff]
    %v282 = vld [vmem:[#allocation2 + $0x140] sm:$0xff]
    %v283 = vld [vmem:[#allocation2 + $0x148] sm:$0xff]
    %v284 = vld [vmem:[#allocation2 + $0x150] sm:$0xff]
    %v285 = vld [vmem:[#allocation2 + $0x158] sm:$0xff]
    %v286 = vld [vmem:[#allocation2 + $0x160] sm:$0xff]
    %v287 = vld [vmem:[#allocation2 + $0x168] sm:$0xff]
    %v288 = vld [vmem:[#allocation2 + $0x170] sm:$0xff]
    %v289 = vld [vmem:[#allocation2 + $0x178] sm:$0xff]
    %v290 = vld [vmem:[#allocation2 + $0x180] sm:$0xff]
    %v291 = vld [vmem:[#allocation2 + $0x188] sm:$0xff]
    %v292 = vld [vmem:[#allocation2 + $0x190] sm:$0xff]
    %v293 = vld [vmem:[#allocation2 + $0x198] sm:$0xff]
    %v294 = vld [vmem:[#allocation2 + $0x1a0] sm:$0xff]
    %v295 = vld [vmem:[#allocation2 + $0x1a8] sm:$0xff]
    %v296 = vld [vmem:[#allocation2 + $0x1b0] sm:$0xff]
    %v297 = vld [vmem:[#allocation2 + $0x1b8] sm:$0xff]
    %v298 = vld [vmem:[#allocation2 + $0x1c0] sm:$0xff]
    %v299 = vld [vmem:[#allocation2 + $0x1c8] sm:$0xff]
    %v300 = vld [vmem:[#allocation2 + $0x1d0] sm:$0xff]
    %v301 = vld [vmem:[#allocation2 + $0x1d8] sm:$0xff]
    %v302 = vld [vmem:[#allocation2 + $0x1e0] sm:$0xff]
    %v303 = vld [vmem:[#allocation2 + $0x1e8] sm:$0xff]
    %v304 = vld [vmem:[#allocation2 + $0x1f0] sm:$0xff]
    %v305 = vld [vmem:[#allocation2 + $0x1f8] sm:$0xff]
    %v306 = vld [vmem:[#allocation2 + $0x200] sm:$0xff]
    %v307 = vld [vmem:[#allocation2 + $0x208] sm:$0xff]
    %v308 = vld [vmem:[#allocation2 + $0x210] sm:$0xff]
    %v309 = vld [vmem:[#allocation2 + $0x218] sm:$0xff]
    %v310 = vld [vmem:[#allocation2 + $0x220] sm:$0xff]
    %v311 = vld [vmem:[#allocation2 + $0x228] sm:$0xff]
    %v312 = vld [vmem:[#allocation2 + $0x230] sm:$0xff]
    %v313 = vld [vmem:[#allocation2 + $0x238] sm:$0xff]
    %v314 = vld [vmem:[#allocation2 + $0x240] sm:$0xff]
    %v315 = vld [vmem:[#allocation2 + $0x248] sm:$0xff]
    %v316 = vld [vmem:[#allocation2 + $0x250] sm:$0xff]
    %v317 = vld [vmem:[#allocation2 + $0x258] sm:$0xff]
    %v318 = vld [vmem:[#allocation2 + $0x260] sm:$0xff]
    %v319 = vld [vmem:[#allocation2 + $0x268] sm:$0xff]
    %v320 = vld [vmem:[#allocation2 + $0x270] sm:$0xff]
    %v321 = vld [vmem:[#allocation2 + $0x278] sm:$0xff]
    %v322 = vld [vmem:[#allocation2 + $0x280] sm:$0xff]
    %v323 = vld [vmem:[#allocation2 + $0x288] sm:$0xff]
    %v324 = vld [vmem:[#allocation2 + $0x290] sm:$0xff]
    %v325 = vld [vmem:[#allocation2 + $0x298] sm:$0xff]
    %v326 = vld [vmem:[#allocation2 + $0x2a0] sm:$0xff]
    %v327 = vld [vmem:[#allocation2 + $0x2a8] sm:$0xff]
    %v328 = vld [vmem:[#allocation2 + $0x2b0] sm:$0xff]
    %v329 = vld [vmem:[#allocation2 + $0x2b8] sm:$0xff]
    %v330 = vld [vmem:[#allocation2 + $0x2c0] sm:$0xff]
    %v331 = vld [vmem:[#allocation2 + $0x2c8] sm:$0xff]
    %v332 = vld [vmem:[#allocation2 + $0x2d0] sm:$0xff]
    %v333 = vld [vmem:[#allocation2 + $0x2d8] sm:$0xff]
    %v334 = vld [vmem:[#allocation2 + $0x2e0] sm:$0xff]
    %v335 = vld [vmem:[#allocation2 + $0x2e8] sm:$0xff]
    %v336 = vld [vmem:[#allocation2 + $0x2f0] sm:$0xff]
    %v337 = vld [vmem:[#allocation2 + $0x2f8] sm:$0xff]
    %v338 = vld [vmem:[#allocation2 + $0x300] sm:$0xff]
    %v339 = vld [vmem:[#allocation2 + $0x308] sm:$0xff]
    %v340 = vld [vmem:[#allocation2 + $0x310] sm:$0xff]
    %v341 = vld [vmem:[#allocation2 + $0x318] sm:$0xff]
    %v342 = vld [vmem:[#allocation2 + $0x320] sm:$0xff]
    %v343 = vld [vmem:[#allocation2 + $0x328] sm:$0xff]
    %v344 = vld [vmem:[#allocation2 + $0x330] sm:$0xff]
    %v345 = vld [vmem:[#allocation2 + $0x338] sm:$0xff]
    %v346 = vld [vmem:[#allocation2 + $0x340] sm:$0xff]
    %v347 = vld [vmem:[#allocation2 + $0x348] sm:$0xff]
    %v348 = vld [vmem:[#allocation2 + $0x350] sm:$0xff]
    %v349 = vld [vmem:[#allocation2 + $0x358] sm:$0xff]
    %v350 = vld [vmem:[#allocation2 + $0x360] sm:$0xff]
    %v351 = vld [vmem:[#allocation2 + $0x368] sm:$0xff]
    %v352 = vld [vmem:[#allocation2 + $0x370] sm:$0xff]
    %v353 = vld [vmem:[#allocation2 + $0x378] sm:$0xff]
    %v354 = vld [vmem:[#allocation2 + $0x380] sm:$0xff]
    %v355 = vld [vmem:[#allocation2 + $0x388] sm:$0xff]
    %v356 = vld [vmem:[#allocation2 + $0x390] sm:$0xff]
    %v357 = vld [vmem:[#allocation2 + $0x398] sm:$0xff]
    %v358 = vld [vmem:[#allocation2 + $0x3a0] sm:$0xff]
    %v359 = vld [vmem:[#allocation2 + $0x3a8] sm:$0xff]
    %v360 = vld [vmem:[#allocation2 + $0x3b0] sm:$0xff]
    %v361 = vld [vmem:[#allocation2 + $0x3b8] sm:$0xff]
    %v362 = vld [vmem:[#allocation2 + $0x3c0] sm:$0xff]
    %v363 = vld [vmem:[#allocation2 + $0x3c8] sm:$0xff]
    %v364 = vld [vmem:[#allocation2 + $0x3d0] sm:$0xff]
    %v365 = vld [vmem:[#allocation2 + $0x3d8] sm:$0xff]
    %v366 = vld [vmem:[#allocation2 + $0x3e0] sm:$0xff]
    %v367 = vld [vmem:[#allocation2 + $0x3e8] sm:$0xff]
    %v368 = vld [vmem:[#allocation2 + $0x3f0] sm:$0xff]
    %v369 = vld [vmem:[#allocation2 + $0x3f8] sm:$0xff]
    %370 = vmatprep.subr.mxu0 %v303
    %371 = vmatpush1.msra.mxu0 %v302
    %372 = vmatprep.subr.mxu0 %v299
    %373 = vmatpush1.msra.mxu0 %v298
    %374 = vmatprep.subr.mxu0 %v295
    %375 = vmatpush1.msra.mxu0 %v294
    %376 = vmatprep.subr.mxu0 %v291
    %377 = vmatpush1.msra.mxu0 %v290
    %378 = vmatprep.subr.mxu0 %v287
    %379 = vmatpush1.msra.mxu0 %v286
    %380 = vmatprep.subr.mxu0 %v283
    %381 = vmatpush1.msra.mxu0 %v282
    %382 = vmatprep.subr.mxu0 %v279
    %383 = vmatpush1.msra.mxu0 %v278
    %384 = vmatprep.subr.mxu0 %v275
    %385 = vmatpush1.msra.mxu0 %v274
    %386 = vmatprep.subr.mxu0 %v271
    %387 = vmatpush1.msra.mxu0 %v270
    %388 = vmatprep.subr.mxu0 %v267
    %389 = vmatpush1.msra.mxu0 %v266
    %390 = vmatprep.subr.mxu0 %v263
    %391 = vmatpush1.msra.mxu0 %v262
    %392 = vmatprep.subr.mxu0 %v259
    %393 = vmatpush1.msra.mxu0 %v258
    %394 = vmatprep.subr.mxu0 %v255
    %395 = vmatpush1.msra.mxu0 %v254
    %396 = vmatprep.subr.mxu0 %v251
    %397 = vmatpush1.msra.mxu0 %v250
    %398 = vmatprep.subr.mxu0 %v247
    %399 = vmatpush1.msra.mxu0 %v246
    %400 = vmatprep.subr.mxu0 %v243
    %401 = vmatpush1.msra.mxu0 %v242
    %402 = vmatprep.subr.mxu0 %v367
    %403 = vmatpush2.msra.mxu0 %v366
    %404 = vmatprep.subr.mxu0 %v363
    %405 = vmatpush2.msra.mxu0 %v362
    %406 = vmatprep.subr.mxu0 %v359
    %407 = vmatpush2.msra.mxu0 %v358
    %408 = vmatprep.subr.mxu0 %v355
    %409 = vmatpush2.msra.mxu0 %v354
    %410 = vmatprep.subr.mxu0 %v351
    %411 = vmatpush2.msra.mxu0 %v350
    %412 = vmatprep.subr.mxu0 %v347
    %413 = vmatpush2.msra.mxu0 %v346
    %414 = vmatprep.subr.mxu0 %v343
    %415 = vmatpush2.msra.mxu0 %v342
    %416 = vmatprep.subr.mxu0 %v339
    %417 = vmatpush2.msra.mxu0 %v338
    %418 = vmatprep.subr.mxu0 %v335
    %419 = vmatpush2.msra.mxu0 %v334
    %420 = vmatprep.subr.mxu0 %v331
    %421 = vmatpush2.msra.mxu0 %v330
    %422 = vmatprep.subr.mxu0 %v327
    %423 = vmatpush2.msra.mxu0 %v326
    %424 = vmatprep.subr.mxu0 %v323
    %425 = vmatpush2.msra.mxu0 %v322
    %426 = vmatprep.subr.mxu0 %v319
    %427 = vmatpush2.msra.mxu0 %v318
    %428 = vmatprep.subr.mxu0 %v315
    %429 = vmatpush2.msra.mxu0 %v314
    %430 = vmatprep.subr.mxu0 %v311
    %431 = vmatpush2.msra.mxu0 %v310
    %432 = vmatprep.subr.mxu0 %v307
    %433 = vmatpush2.msra.mxu0 %v306
    %434 = vmatprep.mubr.f32.mxu0 %v234
    %435 = vmatmul.mubr.f32.gmra.mxu0 %v232
    %v436 = vpop.f32.mrf.mxu0
    %v437 = vadd.f32 0.0, %v436
    %v438 = vpop.f32.mrf.mxu0
    %v439 = vadd.f32 0.0, %v438
    %440 = vmatprep.mubr.f32.mxu0 %v240
    %441 = vmatmul.mubr.f32.gmra.mxu0 %v238
    %v442 = vpop.f32.mrf.mxu0
    %v443 = vadd.f32 0.0, %v442
    %v444 = vpop.f32.mrf.mxu0
    %v445 = vadd.f32 0.0, %v444
    %446 = vdwg.mxu0
    %447 = vmatprep.subr.mxu0 %v305
    %448 = vmatpush1.msra.mxu0 %v304
    %449 = vmatprep.subr.mxu0 %v301
    %450 = vmatpush1.msra.mxu0 %v300
    %451 = vmatprep.subr.mxu0 %v297
    %452 = vmatpush1.msra.mxu0 %v296
    %453 = vmatprep.subr.mxu0 %v293
    %454 = vmatpush1.msra.mxu0 %v292
    %455 = vmatprep.subr.mxu0 %v289
    %456 = vmatpush1.msra.mxu0 %v288
    %457 = vmatprep.subr.mxu0 %v285
    %458 = vmatpush1.msra.mxu0 %v284
    %459 = vmatprep.subr.mxu0 %v281
    %460 = vmatpush1.msra.mxu0 %v280
    %461 = vmatprep.subr.mxu0 %v277
    %462 = vmatpush1.msra.mxu0 %v276
    %463 = vmatprep.subr.mxu0 %v273
    %464 = vmatpush1.msra.mxu0 %v272
    %465 = vmatprep.subr.mxu0 %v269
    %466 = vmatpush1.msra.mxu0 %v268
    %467 = vmatprep.subr.mxu0 %v265
    %468 = vmatpush1.msra.mxu0 %v264
    %469 = vmatprep.subr.mxu0 %v261
    %470 = vmatpush1.msra.mxu0 %v260
    %471 = vmatprep.subr.mxu0 %v257
    %472 = vmatpush1.msra.mxu0 %v256
    %473 = vmatprep.subr.mxu0 %v253
    %474 = vmatpush1.msra.mxu0 %v252
    %475 = vmatprep.subr.mxu0 %v249
    %476 = vmatpush1.msra.mxu0 %v248
    %477 = vmatprep.subr.mxu0 %v245
    %478 = vmatpush1.msra.mxu0 %v244
    %479 = vmatprep.subr.mxu0 %v369
    %480 = vmatpush2.msra.mxu0 %v368
    %481 = vmatprep.subr.mxu0 %v365
    %482 = vmatpush2.msra.mxu0 %v364
    %483 = vmatprep.subr.mxu0 %v361
    %484 = vmatpush2.msra.mxu0 %v360
    %485 = vmatprep.subr.mxu0 %v357
    %486 = vmatpush2.msra.mxu0 %v356
    %487 = vmatprep.subr.mxu0 %v353
    %488 = vmatpush2.msra.mxu0 %v352
    %489 = vmatprep.subr.mxu0 %v349
    %490 = vmatpush2.msra.mxu0 %v348
    %491 = vmatprep.subr.mxu0 %v345
    %492 = vmatpush2.msra.mxu0 %v344
    %493 = vmatprep.subr.mxu0 %v341
    %494 = vmatpush2.msra.mxu0 %v340
    %495 = vmatprep.subr.mxu0 %v337
    %496 = vmatpush2.msra.mxu0 %v336
    %497 = vmatprep.subr.mxu0 %v333
    %498 = vmatpush2.msra.mxu0 %v332
    %499 = vmatprep.subr.mxu0 %v329
    %500 = vmatpush2.msra.mxu0 %v328
    %501 = vmatprep.subr.mxu0 %v325
    %502 = vmatpush2.msra.mxu0 %v324
    %503 = vmatprep.subr.mxu0 %v321
    %504 = vmatpush2.msra.mxu0 %v320
    %505 = vmatprep.subr.mxu0 %v317
    %506 = vmatpush2.msra.mxu0 %v316
    %507 = vmatprep.subr.mxu0 %v313
    %508 = vmatpush2.msra.mxu0 %v312
    %509 = vmatprep.subr.mxu0 %v309
    %510 = vmatpush2.msra.mxu0 %v308
    %511 = vmatprep.mubr.f32.mxu0 %v234
    %512 = vmatmul.mubr.f32.gmra.mxu0 %v232
    %v513 = vpop.f32.mrf.mxu0
    %v514 = vadd.f32 0.0, %v513
    %v515 = vpop.f32.mrf.mxu0
    %v516 = vadd.f32 0.0, %v515
    %517 = vmatprep.mubr.f32.mxu0 %v240
    %518 = vmatmul.mubr.f32.gmra.mxu0 %v238
    %v519 = vpop.f32.mrf.mxu0
    %v520 = vadd.f32 0.0, %v519
    %v521 = vpop.f32.mrf.mxu0
    %v522 = vadd.f32 0.0, %v521
    %523 = vdwg.mxu0
    %v524 = vld [vmem:[%s5] sm:$0xff]
    %v525 = vld [vmem:[%s5 + $0x8] sm:$0xff]
    %v526 = vld [vmem:[%s5 + $0x10] sm:$0xff]
    %v527 = vld [vmem:[%s5 + $0x18] sm:$0xff]
    %v528 = vld [vmem:[%s5 + $0x20] sm:$0xff]
    %v529 = vld [vmem:[%s5 + $0x28] sm:$0xff]
    %v530 = vld [vmem:[%s5 + $0x30] sm:$0xff]
    %v531 = vld [vmem:[%s5 + $0x38] sm:$0xff]
    %v532 = vld [vmem:[%s5 + $0x40] sm:$0xff]
    %v533 = vld [vmem:[%s5 + $0x48] sm:$0xff]
    %v534 = vld [vmem:[%s5 + $0x50] sm:$0xff]
    %v535 = vld [vmem:[%s5 + $0x58] sm:$0xff]
    %v536 = vld [vmem:[%s5 + $0x60] sm:$0xff]
    %v537 = vld [vmem:[%s5 + $0x68] sm:$0xff]
    %v538 = vld [vmem:[%s5 + $0x70] sm:$0xff]
    %v539 = vld [vmem:[%s5 + $0x78] sm:$0xff]
    %v540 = vld [vmem:[%s5 + $0x80] sm:$0xff]
    %v541 = vld [vmem:[%s5 + $0x88] sm:$0xff]
    %v542 = vld [vmem:[%s5 + $0x90] sm:$0xff]
    %v543 = vld [vmem:[%s5 + $0x98] sm:$0xff]
    %v544 = vld [vmem:[%s5 + $0xa0] sm:$0xff]
    %v545 = vld [vmem:[%s5 + $0xa8] sm:$0xff]
    %v546 = vld [vmem:[%s5 + $0xb0] sm:$0xff]
    %v547 = vld [vmem:[%s5 + $0xb8] sm:$0xff]
    %v548 = vld [vmem:[%s5 + $0xc0] sm:$0xff]
    %v549 = vld [vmem:[%s5 + $0xc8] sm:$0xff]
    %v550 = vld [vmem:[%s5 + $0xd0] sm:$0xff]
    %v551 = vld [vmem:[%s5 + $0xd8] sm:$0xff]
    %v552 = vld [vmem:[%s5 + $0xe0] sm:$0xff]
    %v553 = vld [vmem:[%s5 + $0xe8] sm:$0xff]
    %v554 = vld [vmem:[%s5 + $0xf0] sm:$0xff]
    %v555 = vld [vmem:[%s5 + $0xf8] sm:$0xff]
    %v556 = vld [vmem:[%s5 + $0x100] sm:$0xff]
    %v557 = vld [vmem:[%s5 + $0x108] sm:$0xff]
    %v558 = vld [vmem:[%s5 + $0x110] sm:$0xff]
    %v559 = vld [vmem:[%s5 + $0x118] sm:$0xff]
    %v560 = vld [vmem:[%s5 + $0x120] sm:$0xff]
    %v561 = vld [vmem:[%s5 + $0x128] sm:$0xff]
    %v562 = vld [vmem:[%s5 + $0x130] sm:$0xff]
    %v563 = vld [vmem:[%s5 + $0x138] sm:$0xff]
    %v564 = vld [vmem:[%s5 + $0x140] sm:$0xff]
    %v565 = vld [vmem:[%s5 + $0x148] sm:$0xff]
    %v566 = vld [vmem:[%s5 + $0x150] sm:$0xff]
    %v567 = vld [vmem:[%s5 + $0x158] sm:$0xff]
    %v568 = vld [vmem:[%s5 + $0x160] sm:$0xff]
    %v569 = vld [vmem:[%s5 + $0x168] sm:$0xff]
    %v570 = vld [vmem:[%s5 + $0x170] sm:$0xff]
    %v571 = vld [vmem:[%s5 + $0x178] sm:$0xff]
    %v572 = vld [vmem:[%s5 + $0x180] sm:$0xff]
    %v573 = vld [vmem:[%s5 + $0x188] sm:$0xff]
    %v574 = vld [vmem:[%s5 + $0x190] sm:$0xff]
    %v575 = vld [vmem:[%s5 + $0x198] sm:$0xff]
    %v576 = vld [vmem:[%s5 + $0x1a0] sm:$0xff]
    %v577 = vld [vmem:[%s5 + $0x1a8] sm:$0xff]
    %v578 = vld [vmem:[%s5 + $0x1b0] sm:$0xff]
    %v579 = vld [vmem:[%s5 + $0x1b8] sm:$0xff]
    %v580 = vld [vmem:[%s5 + $0x1c0] sm:$0xff]
    %v581 = vld [vmem:[%s5 + $0x1c8] sm:$0xff]
    %v582 = vld [vmem:[%s5 + $0x1d0] sm:$0xff]
    %v583 = vld [vmem:[%s5 + $0x1d8] sm:$0xff]
    %v584 = vld [vmem:[%s5 + $0x1e0] sm:$0xff]
    %v585 = vld [vmem:[%s5 + $0x1e8] sm:$0xff]
    %v586 = vld [vmem:[%s5 + $0x1f0] sm:$0xff]
    %v587 = vld [vmem:[%s5 + $0x1f8] sm:$0xff]
    %588 = vmatprep.subr.mxu0 0.0
    %589 = vmatpush1.msra.mxu0 %v539
    %590 = vmatprep.subr.mxu0 0.0
    %591 = vmatpush1.msra.mxu0 %v538
    %592 = vmatprep.subr.mxu0 0.0
    %593 = vmatpush1.msra.mxu0 %v537
    %594 = vmatprep.subr.mxu0 0.0
    %595 = vmatpush1.msra.mxu0 %v536
    %596 = vmatprep.subr.mxu0 0.0
    %597 = vmatpush1.msra.mxu0 %v535
    %598 = vmatprep.subr.mxu0 0.0
    %599 = vmatpush1.msra.mxu0 %v534
    %600 = vmatprep.subr.mxu0 0.0
    %601 = vmatpush1.msra.mxu0 %v533
    %602 = vmatprep.subr.mxu0 0.0
    %603 = vmatpush1.msra.mxu0 %v532
    %604 = vmatprep.subr.mxu0 0.0
    %605 = vmatpush1.msra.mxu0 %v531
    %606 = vmatprep.subr.mxu0 0.0
    %607 = vmatpush1.msra.mxu0 %v530
    %608 = vmatprep.subr.mxu0 0.0
    %609 = vmatpush1.msra.mxu0 %v529
    %610 = vmatprep.subr.mxu0 0.0
    %611 = vmatpush1.msra.mxu0 %v528
    %612 = vmatprep.subr.mxu0 0.0
    %613 = vmatpush1.msra.mxu0 %v527
    %614 = vmatprep.subr.mxu0 0.0
    %615 = vmatpush1.msra.mxu0 %v526
    %616 = vmatprep.subr.mxu0 0.0
    %617 = vmatpush1.msra.mxu0 %v525
    %618 = vmatprep.subr.mxu0 0.0
    %619 = vmatpush1.msra.mxu0 %v524
    %620 = vmatprep.subr.mxu0 0.0
    %621 = vmatpush2.msra.mxu0 %v555
    %622 = vmatprep.subr.mxu0 0.0
    %623 = vmatpush2.msra.mxu0 %v554
    %624 = vmatprep.subr.mxu0 0.0
    %625 = vmatpush2.msra.mxu0 %v553
    %626 = vmatprep.subr.mxu0 0.0
    %627 = vmatpush2.msra.mxu0 %v552
    %628 = vmatprep.subr.mxu0 0.0
    %629 = vmatpush2.msra.mxu0 %v551
    %630 = vmatprep.subr.mxu0 0.0
    %631 = vmatpush2.msra.mxu0 %v550
    %632 = vmatprep.subr.mxu0 0.0
    %633 = vmatpush2.msra.mxu0 %v549
    %634 = vmatprep.subr.mxu0 0.0
    %635 = vmatpush2.msra.mxu0 %v548
    %636 = vmatprep.subr.mxu0 0.0
    %637 = vmatpush2.msra.mxu0 %v547
    %638 = vmatprep.subr.mxu0 0.0
    %639 = vmatpush2.msra.mxu0 %v546
    %640 = vmatprep.subr.mxu0 0.0
    %641 = vmatpush2.msra.mxu0 %v545
    %642 = vmatprep.subr.mxu0 0.0
    %643 = vmatpush2.msra.mxu0 %v544
    %644 = vmatprep.subr.mxu0 0.0
    %645 = vmatpush2.msra.mxu0 %v543
    %646 = vmatprep.subr.mxu0 0.0
    %647 = vmatpush2.msra.mxu0 %v542
    %648 = vmatprep.subr.mxu0 0.0
    %649 = vmatpush2.msra.mxu0 %v541
    %650 = vmatprep.subr.mxu0 0.0
    %651 = vmatpush2.msra.mxu0 %v540
    %652 = vmatprep.mubr.f32.mxu0 %v439
    %653 = vmatmul.mubr.f32.gmra.mxu0 %v437
    %v654 = vpop.f32.mrf.mxu0
    %v655 = vadd.f32 0.0, %v654
    %v656 = vpop.f32.mrf.mxu0
    %657 = vmatprep.mubr.f32.mxu0 %v445
    %658 = vmatmul.mubr.f32.gmra.mxu0 %v443
    %v659 = vpop.f32.mrf.mxu0
    %v660 = vadd.f32 0.0, %v659
    %v661 = vpop.f32.mrf.mxu0
    %662 = vdwg.mxu0
    %663 = vmatprep.subr.mxu0 0.0
    %664 = vmatpush1.msra.mxu0 %v571
    %665 = vmatprep.subr.mxu0 0.0
    %666 = vmatpush1.msra.mxu0 %v570
    %667 = vmatprep.subr.mxu0 0.0
    %668 = vmatpush1.msra.mxu0 %v569
    %669 = vmatprep.subr.mxu0 0.0
    %670 = vmatpush1.msra.mxu0 %v568
    %671 = vmatprep.subr.mxu0 0.0
    %672 = vmatpush1.msra.mxu0 %v567
    %673 = vmatprep.subr.mxu0 0.0
    %674 = vmatpush1.msra.mxu0 %v566
    %675 = vmatprep.subr.mxu0 0.0
    %676 = vmatpush1.msra.mxu0 %v565
    %677 = vmatprep.subr.mxu0 0.0
    %678 = vmatpush1.msra.mxu0 %v564
    %679 = vmatprep.subr.mxu0 0.0
    %680 = vmatpush1.msra.mxu0 %v563
    %681 = vmatprep.subr.mxu0 0.0
    %682 = vmatpush1.msra.mxu0 %v562
    %683 = vmatprep.subr.mxu0 0.0
    %684 = vmatpush1.msra.mxu0 %v561
    %685 = vmatprep.subr.mxu0 0.0
    %686 = vmatpush1.msra.mxu0 %v560
    %687 = vmatprep.subr.mxu0 0.0
    %688 = vmatpush1.msra.mxu0 %v559
    %689 = vmatprep.subr.mxu0 0.0
    %690 = vmatpush1.msra.mxu0 %v558
    %691 = vmatprep.subr.mxu0 0.0
    %692 = vmatpush1.msra.mxu0 %v557
    %693 = vmatprep.subr.mxu0 0.0
    %694 = vmatpush1.msra.mxu0 %v556
    %695 = vmatprep.subr.mxu0 0.0
    %696 = vmatpush2.msra.mxu0 %v587
    %697 = vmatprep.subr.mxu0 0.0
    %698 = vmatpush2.msra.mxu0 %v586
    %699 = vmatprep.subr.mxu0 0.0
    %700 = vmatpush2.msra.mxu0 %v585
    %701 = vmatprep.subr.mxu0 0.0
    %702 = vmatpush2.msra.mxu0 %v584
    %703 = vmatprep.subr.mxu0 0.0
    %704 = vmatpush2.msra.mxu0 %v583
    %705 = vmatprep.subr.mxu0 0.0
    %706 = vmatpush2.msra.mxu0 %v582
    %707 = vmatprep.subr.mxu0 0.0
    %708 = vmatpush2.msra.mxu0 %v581
    %709 = vmatprep.subr.mxu0 0.0
    %710 = vmatpush2.msra.mxu0 %v580
    %711 = vmatprep.subr.mxu0 0.0
    %712 = vmatpush2.msra.mxu0 %v579
    %713 = vmatprep.subr.mxu0 0.0
    %714 = vmatpush2.msra.mxu0 %v578
    %715 = vmatprep.subr.mxu0 0.0
    %716 = vmatpush2.msra.mxu0 %v577
    %717 = vmatprep.subr.mxu0 0.0
    %718 = vmatpush2.msra.mxu0 %v576
    %719 = vmatprep.subr.mxu0 0.0
    %720 = vmatpush2.msra.mxu0 %v575
    %721 = vmatprep.subr.mxu0 0.0
    %722 = vmatpush2.msra.mxu0 %v574
    %723 = vmatprep.subr.mxu0 0.0
    %724 = vmatpush2.msra.mxu0 %v573
    %725 = vmatprep.subr.mxu0 0.0
    %726 = vmatpush2.msra.mxu0 %v572
    %727 = vmatprep.mubr.f32.mxu0 %v516
    %728 = vmatmul.mubr.f32.gmra.mxu0 %v514
    %v729 = vpop.f32.mrf.mxu0
    %v730 = vadd.f32 %v655, %v729
    %v731 = vpop.f32.mrf.mxu0
    %732 = vmatprep.mubr.f32.mxu0 %v522
    %733 = vmatmul.mubr.f32.gmra.mxu0 %v520
    %v734 = vpop.f32.mrf.mxu0
    %v735 = vadd.f32 %v660, %v734
    %v736 = vpop.f32.mrf.mxu0
    %737 = vdwg.mxu0
    %v738 = vmax.f32 %v730, 0.0
    %v739 = vmax.f32 %v735, 0.0
    %vm740 = vcmask 261120
    %741 = vst.msk [vmem:[#allocation6] sm:$0xff] %vm740, %v738
    %742 = vst.msk [vmem:[#allocation6 + $0x8] sm:$0xff] %vm740, %v739
    %v743 = vld [vmem:[%s0] sm:$0xff]
    %vm744 = vcmask 130048
    %v746 = vsel %vm744, %v743, 0
    %748 = vmatprep.subr.mxu0 0.0
    %749 = vmatpush1.msra.mxu0 0.0
    %750 = vmatprep.subr.mxu0 0.0
    %751 = vmatpush1.msra.mxu0 0.0
    %752 = vmatprep.subr.mxu0 0.0
    %753 = vmatpush1.msra.mxu0 0.0
    %754 = vmatprep.subr.mxu0 0.0
    %755 = vmatpush1.msra.mxu0 0.0
    %756 = vmatprep.subr.mxu0 0.0
    %757 = vmatpush1.msra.mxu0 0.0
    %758 = vmatprep.subr.mxu0 0.0
    %759 = vmatpush1.msra.mxu0 0.0
    %760 = vmatprep.subr.mxu0 0.0
    %761 = vmatpush1.msra.mxu0 0.0
    %762 = vmatprep.subr.mxu0 0.0
    %763 = vmatpush1.msra.mxu0 0.0
    %764 = vmatprep.subr.mxu0 0.0
    %765 = vmatpush1.msra.mxu0 0.0
    %766 = vmatprep.subr.mxu0 0.0
    %767 = vmatpush1.msra.mxu0 0.0
    %768 = vmatprep.subr.mxu0 0.0
    %769 = vmatpush1.msra.mxu0 0.0
    %770 = vmatprep.subr.mxu0 0.0
    %771 = vmatpush1.msra.mxu0 0.0
    %772 = vmatprep.subr.mxu0 0.0
    %773 = vmatpush1.msra.mxu0 0.0
    %774 = vmatprep.subr.mxu0 0.0
    %775 = vmatpush1.msra.mxu0 0.0
    %776 = vmatprep.subr.mxu0 0.0
    %777 = vmatpush1.msra.mxu0 %v739
    %778 = vmatprep.subr.mxu0 0.0
    %779 = vmatpush1.msra.mxu0 %v738
    %780 = vmatprep.subr.mxu0 0.0
    %781 = vmatpush2.msra.mxu0 0.0
    %782 = vmatprep.subr.mxu0 0.0
    %783 = vmatpush2.msra.mxu0 0.0
    %784 = vmatprep.subr.mxu0 0.0
    %785 = vmatpush2.msra.mxu0 0.0
    %786 = vmatprep.subr.mxu0 0.0
    %787 = vmatpush2.msra.mxu0 0.0
    %788 = vmatprep.subr.mxu0 0.0
    %789 = vmatpush2.msra.mxu0 0.0
    %790 = vmatprep.subr.mxu0 0.0
    %791 = vmatpush2.msra.mxu0 0.0
    %792 = vmatprep.subr.mxu0 0.0
    %793 = vmatpush2.msra.mxu0 0.0
    %794 = vmatprep.subr.mxu0 0.0
    %795 = vmatpush2.msra.mxu0 0.0
    %796 = vmatprep.subr.mxu0 0.0
    %797 = vmatpush2.msra.mxu0 0.0
    %798 = vmatprep.subr.mxu0 0.0
    %799 = vmatpush2.msra.mxu0 0.0
    %800 = vmatprep.subr.mxu0 0.0
    %801 = vmatpush2.msra.mxu0 0.0
    %802 = vmatprep.subr.mxu0 0.0
    %803 = vmatpush2.msra.mxu0 0.0
    %804 = vmatprep.subr.mxu0 0.0
    %805 = vmatpush2.msra.mxu0 0.0
    %806 = vmatprep.subr.mxu0 0.0
    %807 = vmatpush2.msra.mxu0 0.0
    %808 = vmatprep.subr.mxu0 0.0
    %809 = vmatpush2.msra.mxu0 0.0
    %810 = vmatprep.subr.mxu0 0.0
    %811 = vmatpush2.msra.mxu0 0.0
    %812 = vmatprep.mubr.f32.mxu0 0.0
    %813 = vmatmul.mubr.f32.gmra.mxu0 %v746
    %v814 = vpop.f32.mrf.mxu0
    %v815 = vadd.f32 0.0, %v814
    %v816 = vpop.f32.mrf.mxu0
    %817 = vdwg.mxu0
    %818 = vst.msk [vmem:[#allocation5] sm:$0xff] %vm740, %v815
    // Predicated region
    $region30: #{channel_decoder.1} parent=1 // pred_check
      _
    $region31: #{channel_decoder.1} parent=1 // pred_check_branch
      %820 = sbr.rel (0) target = $region33
    $region32: #{channel_decoder.1} parent=1 // pred_region
      %s822 = ssub.s32 128, 128
      %823 = vsyncadd [#allocation4], %s822
      %s825 = sshll.u32 [#allocation5], 4
      %s826 = int_to_ptr.vmem [resolvable:$true] %s825
      %828 = dma.vmem_to_hbm [thread:$0]  %s826, 128, %s6, [#allocation4]
    $region33: #{channel_decoder.1} parent=1 // pred_fallthru
      _
    // Predicated region
    $region34: #{channel_decoder.1} parent=1 // pred_check
      _
    $region35: #{channel_decoder.1} parent=1 // pred_check_branch
      %830 = sbr.rel (0) target = $region37
    $region36: #{channel_decoder.1} parent=1 // pred_region
      %s832 = ssub.s32 256, 256
      %833 = vsyncadd [#allocation7], %s832
      %s834 = sshll.u32 [#allocation6], 4
      %s835 = int_to_ptr.vmem [resolvable:$true] %s834
      %840 = dma.vmem_to_hbm [thread:$0]  %s835, 256, %s7, [#allocation7], 128, 128, 8
    $region37: #{channel_decoder.1} parent=1 // pred_fallthru
      _
    // Predicated region
    $region38: #{channel_decoder.1} parent=1 // pred_check
      _
    $region39: #{channel_decoder.1} parent=1 // pred_check_branch
      %842 = sbr.rel (0) target = $region41
    $region40: #{channel_decoder.1} parent=1 // pred_region
      %843 = dma.done [#allocation4], 128
    $region41: #{channel_decoder.1} parent=1 // pred_fallthru
      _
    // Predicated region
    $region42: #{channel_decoder.1} parent=1 // pred_check
      _
    $region43: #{channel_decoder.1} parent=1 // pred_check_branch
      %845 = sbr.rel (0) target = $region45
    $region44: #{channel_decoder.1} parent=1 // pred_region
      %846 = dma.done [#allocation7], 256
    $region45: #{channel_decoder.1} parent=1 // pred_fallthru
      _
    %847 = vsyncpa [#allocation3], 1
    %848 = vsyncpa [#allocation4], 1
    %849 = vsyncpa [#allocation7], 1

</llo_original>
